<compile_context>
chip_gen: v7x
topology: tpu7x:2x2x1
jax: 0.10.0
libtpu: 0.0.40
codegen_flags: <defaults>
</compile_context>

<pallas_src>
import math
import functools

import jax
import jax.numpy as jnp
from jax import lax
from jax.experimental import pallas as pl
from jax.experimental.pallas import tpu as pltpu


def _attention_kernel(q_ref, k_ref, v_ref, wo_ref, bo_ref, *refs,
                      q_tile: int, causal: bool, store_attn: bool):
    if store_attn:
        o_ref, attn_ref, acc_ref = refs
    else:
        o_ref, acc_ref = refs
        attn_ref = None

    q_idx = pl.program_id(1)
    h_idx = pl.program_id(2)
    n_heads = pl.num_programs(2)

    q = q_ref[0, 0]            # (TQ, d_k) bf16; 1/sqrt(d_k) already folded in
    k = k_ref[0, 0]            # (S,  d_k) bf16
    v = v_ref[0, 0]            # (S,  d_k) bf16

    # scores = Q @ K^T : contract last dims, no explicit transpose.
    scores = lax.dot_general(q, k,
                             dimension_numbers=(((1,), (1,)), ((), ())),
                             preferred_element_type=jnp.float32)     # (TQ, S) f32

    if causal:
        seq_len = k.shape[0]
        row = q_idx * q_tile + lax.broadcasted_iota(jnp.int32, (q_tile, seq_len), 0)
        col = lax.broadcasted_iota(jnp.int32, (q_tile, seq_len), 1)
        scores = jnp.where(col > row, -jnp.inf, scores)

    # Numerically stable softmax in f32. (The causal diagonal is never masked,
    # so a fully-masked row / zero denominator cannot occur.)
    m = jnp.max(scores, axis=-1, keepdims=True)
    e = jnp.exp(scores - m)
    denom = jnp.sum(e, axis=-1, keepdims=True)
    w = e * pl.reciprocal(denom, approx=True)                        # (TQ, S) f32

    if store_attn:
        attn_ref[0, 0] = w.astype(attn_ref.dtype)                    # bf16 writeback

    ctx = jnp.dot(w.astype(v.dtype), v,
                  preferred_element_type=jnp.float32)                # (TQ, d_k) f32

    @pl.when(h_idx == 0)
    def _():
        acc_ref[...] = jnp.zeros_like(acc_ref)

    wo_h = wo_ref[h_idx]                                             # (d_k, d_out) bf16
    acc_ref[...] += jnp.dot(ctx.astype(wo_h.dtype), wo_h,
                            preferred_element_type=jnp.float32)      # (TQ, d_out) f32

    @pl.when(h_idx == n_heads - 1)
    def _():
        o_ref[0] = (acc_ref[...] + bo_ref[...]).astype(o_ref.dtype)


def _choose_q_tile(seq_len: int, target: int) -> int:
    if seq_len <= target:
        return seq_len
    # bf16 tiles are (16, 128): step in multiples of 16, then 8.
    start16 = target - (target % 16)
    for t in range(start16, 15, -16):
        if seq_len % t == 0:
            return t
    start8 = target - (target % 8)
    for t in range(start8, 7, -8):
        if seq_len % t == 0:
            return t
    # TODO(synk): pad the sequence instead of falling back to a full-S tile.
    return seq_len


def _default_block_q() -> int:
    # v6e: 256 fills the 256-wide MXU; v5e (128-wide MXU) and v7x (64 MiB VMEM
    # at long S) prefer 128.  128 is the universally safe fallback.
    try:
        ver = str(pltpu.get_tpu_info().chip_version).lower()
        if "v6" in ver or "6e" in ver:
            return 256
    except Exception:
        pass
    return 128


def _default_vmem_limit_bytes() -> int:
    try:
        cap = int(pltpu.get_tpu_info().vmem_capacity_bytes)
        # ~85% of physical, capped at 100 MiB (v5e/v6e: 128 MiB, v7x: 64 MiB).
        return min(int(cap * 0.85), 100 * 1024 * 1024)
    except Exception:
        return 64 * 1024 * 1024


def self_attention_pallas(x, params, n_heads: int, mask: bool = False, *,
                          compute_dtype=jnp.bfloat16,
                          attn_weights_dtype=jnp.bfloat16,
                          return_attn_weights: bool = True,
                          block_q: int | None = None,
                          vmem_limit_bytes: int | None = None):
    """x: (B, S, d_model).  params: PyTorch-convention Linear weights:
       Wq_w (H*d_k, d_model), Wq_b (H*d_k,), likewise Wk/Wv; Wo_w (d_out, H*d_k).
       Returns (O, {'attn_weights': ...}) like the PyTorch module (attn in bf16
       by default; pass return_attn_weights=False to elide the S^2 writeback)."""
    B, S, D = x.shape
    d_qkv = params["Wq_w"].shape[0]
    assert d_qkv % n_heads == 0
    d_k = d_qkv // n_heads
    d_out = params["Wo_w"].shape[0]

    if block_q is None:
        block_q = _default_block_q()
    TQ = _choose_q_tile(S, block_q)
    n_q = S // TQ
    if vmem_limit_bytes is None:
        vmem_limit_bytes = _default_vmem_limit_bytes()

    f32 = jnp.float32
    scale = 1.0 / math.sqrt(float(d_k))

    # ---- Fused, wide QKV projection (one MXU-efficient matmul; per review the
    # projection is hoisted out of the attention kernel and done as a plain XLA
    # matmul producing head-major (B, H, S, d_k) operands in HBM). ----
    wqkv = jnp.concatenate([params["Wq_w"], params["Wk_w"], params["Wv_w"]],
                           axis=0).T.astype(compute_dtype)             # (D, 3*H*d_k)
    bqkv = jnp.concatenate([params["Wq_b"], params["Wk_b"], params["Wv_b"]],
                           axis=0).astype(f32)                          # (3*H*d_k,)
    qkv = jnp.dot(x.astype(compute_dtype), wqkv,
                  preferred_element_type=f32) + bqkv                    # (B, S, 3*H*d_k)
    qkv = qkv.reshape(B, S, 3, n_heads, d_k).transpose(2, 0, 3, 1, 4)   # (3, B, H, S, d_k)
    q = (qkv[0] * scale).astype(compute_dtype)    # fold 1/sqrt(d_k) before bf16 cast
    k = qkv[1].astype(compute_dtype)
    v = qkv[2].astype(compute_dtype)

    # Head-major output-projection weight; VMEM-resident for the whole kernel.
    wo = params["Wo_w"].T.reshape(n_heads, d_k, d_out).astype(compute_dtype)
    bo = params["Wo_b"].reshape(1, d_out).astype(f32)

    kernel = functools.partial(_attention_kernel, q_tile=TQ, causal=bool(mask),
                               store_attn=return_attn_weights)

    in_specs = [
        pl.BlockSpec((1, 1, TQ, d_k), lambda b, qi, h: (b, h, qi, 0)),    # Q tile
        pl.BlockSpec((1, 1, S, d_k), lambda b, qi, h: (b, h, 0, 0)),      # K (per head)
        pl.BlockSpec((1, 1, S, d_k), lambda b, qi, h: (b, h, 0, 0)),      # V (per head)
        pl.BlockSpec((n_heads, d_k, d_out), lambda b, qi, h: (0, 0, 0)),  # Wo (resident)
        pl.BlockSpec((1, d_out), lambda b, qi, h: (0, 0)),                # bo (resident)
    ]
    o_spec = pl.BlockSpec((1, TQ, d_out), lambda b, qi, h: (b, qi, 0))
    o_shape = jax.ShapeDtypeStruct((B, S, d_out), x.dtype)

    if return_attn_weights:
        out_specs = [o_spec,
                     pl.BlockSpec((1, 1, TQ, S), lambda b, qi, h: (b, h, qi, 0))]
        out_shape = (o_shape,
                     jax.ShapeDtypeStruct((B, n_heads, S, S), attn_weights_dtype))
    else:
        out_specs = o_spec
        out_shape = o_shape

    scratch_shapes = [pltpu.VMEM((TQ, d_out), jnp.float32)]   # Wo accumulator

    itemsize_c = jnp.dtype(compute_dtype).itemsize
    flops = (2 * 2 * B * n_heads * S * S * d_k               # scores + context
             + 2 * B * S * (n_heads * d_k) * d_out)          # output projection
    transcendentals = B * n_heads * S * S                    # exp
    bytes_accessed = int(
        3 * B * n_heads * S * d_k * itemsize_c               # Q/K/V reads
        + wo.size * itemsize_c + bo.size * 4
        + B * S * d_out * jnp.dtype(x.dtype).itemsize        # O write
        + (B * n_heads * S * S * jnp.dtype(attn_weights_dtype).itemsize
           if return_attn_weights else 0))

    result = pl.pallas_call(
        kernel,
        out_shape=out_shape,
        grid_spec=pltpu.PrefetchScalarGridSpec(
            num_scalar_prefetch=0,
            grid=(B, n_q, n_heads),
            in_specs=in_specs,
            out_specs=out_specs,
            scratch_shapes=scratch_shapes,
        ),
        compiler_params=pltpu.CompilerParams(
            # K/V are streamed per (batch, head) from HBM, so batch AND query
            # tiles are independent ("parallel" -> both TensorCores on v7x);
            # heads is the Wo-accumulator reduction axis ("arbitrary").
            dimension_semantics=("parallel", "parallel", "arbitrary"),
            vmem_limit_bytes=int(vmem_limit_bytes),
        ),
        cost_estimate=pl.CostEstimate(
            flops=int(flops),
            transcendentals=int(transcendentals),
            bytes_accessed=bytes_accessed,
        ),
    )(q, k, v, wo, bo)

    if return_attn_weights:
        O, attn = result
        return O, {"attn_weights": attn}
    return result, {}


def _reference(x, params, n_heads, mask=False):
    """Pure-JAX f32 reference mirroring the PyTorch forward."""
    B, S, _ = x.shape
    d_qkv = params["Wq_w"].shape[0]
    d_k = d_qkv // n_heads

    def lin(t, w, b):
        return t @ w.T + b

    Q = lin(x, params["Wq_w"], params["Wq_b"]).reshape(B, S, n_heads, d_k).transpose(0, 2, 1, 3)
    K = lin(x, params["Wk_w"], params["Wk_b"]).reshape(B, S, n_heads, d_k).transpose(0, 2, 1, 3)
    V = lin(x, params["Wv_w"], params["Wv_b"]).reshape(B, S, n_heads, d_k).transpose(0, 2, 1, 3)
    scores = jnp.einsum("bhqd,bhkd->bhqk", Q, K) / jnp.sqrt(jnp.float32(d_k))
    if mask:
        causal = jnp.triu(jnp.ones((S, S), dtype=bool), k=1)
        scores = jnp.where(causal[None, None], -jnp.inf, scores)
    w = jax.nn.softmax(scores, axis=-1)
    ctx = jnp.einsum("bhqk,bhkd->bhqd", w, V).transpose(0, 2, 1, 3).reshape(B, S, n_heads * d_k)
    O = lin(ctx, params["Wo_w"], params["Wo_b"])
    return O, w


if __name__ == "__main__":
    B, S, d_model, n_heads = 2, 8, 32, 2
    d_k = d_model // n_heads

    key = jax.random.PRNGKey(0)
    keys = jax.random.split(key, 9)

    def init_linear(kw, kb, in_f, out_f):
        bound = 1.0 / math.sqrt(in_f)
        w = jax.random.uniform(kw, (out_f, in_f), jnp.float32, -bound, bound)
        b = jax.random.uniform(kb, (out_f,), jnp.float32, -bound, bound)
        return w, b

    Wq_w, Wq_b = init_linear(keys[0], keys[1], d_model, d_k * n_heads)
    Wk_w, Wk_b = init_linear(keys[2], keys[3], d_model, d_k * n_heads)
    Wv_w, Wv_b = init_linear(keys[4], keys[5], d_model, d_k * n_heads)
    Wo_w, Wo_b = init_linear(keys[6], keys[7], d_k * n_heads, d_model)

    params = {
        "Wq_w": Wq_w, "Wq_b": Wq_b,
        "Wk_w": Wk_w, "Wk_b": Wk_b,
        "Wv_w": Wv_w, "Wv_b": Wv_b,
        "Wo_w": Wo_w, "Wo_b": Wo_b,
    }

    x = jax.random.normal(keys[8], (B, S, d_model), jnp.float32)

    for use_mask in (False, True):
        O, aux = self_attention_pallas(x, params, n_heads, mask=use_mask)
        O = jax.block_until_ready(O)
        attn = jax.block_until_ready(aux["attn_weights"])

        O_ref, attn_ref = _reference(x, params, n_heads, mask=use_mask)
        assert O.shape == (B, S, d_model)
        assert attn.shape == (B, n_heads, S, S)
        # bf16 MXU inputs / bf16 attn storage with f32 accumulation.
        assert jnp.allclose(O, O_ref, atol=2e-2, rtol=2e-2), f"O mismatch (mask={use_mask})"
        assert jnp.allclose(attn.astype(jnp.float32), attn_ref, atol=2e-2, rtol=2e-2), \
            f"attn mismatch (mask={use_mask})"

    # Fast path: elide the S^2 attention-weights writeback entirely.
    O_fast, _ = self_attention_pallas(x, params, n_heads, mask=True,
                                      return_attn_weights=False)
    O_fast = jax.block_until_ready(O_fast)
    O_ref, _ = _reference(x, params, n_heads, mask=True)
    assert jnp.allclose(O_fast, O_ref, atol=2e-2, rtol=2e-2), "O mismatch (no-attn path)"

    print("KERNEL_OK")
</pallas_src>

<mosaic_0001>
module attributes {stable_mosaic.version = 11 : i64} {
  func.func @_attention_kernel(%arg0: i32, %arg1: i32, %arg2: i32, %arg3: memref<1x1x8x16xbf16, #tpu.memory_space<vmem>>, %arg4: memref<1x1x8x16xbf16, #tpu.memory_space<vmem>>, %arg5: memref<1x1x8x16xbf16, #tpu.memory_space<vmem>>, %arg6: memref<2x16x32xbf16, #tpu.memory_space<vmem>>, %arg7: memref<1x32xf32, #tpu.memory_space<vmem>>, %arg8: memref<1x8x32xf32, #tpu.memory_space<vmem>>, %arg9: memref<1x1x8x8xbf16, #tpu.memory_space<vmem>>, %arg10: memref<8x32xf32, #tpu.memory_space<vmem>>) attributes {dimension_semantics = [#tpu.dimension_semantics<parallel>, #tpu.dimension_semantics<parallel>, #tpu.dimension_semantics<arbitrary>], iteration_bounds = array<i64: 2, 1, 2>, scalar_prefetch = 0 : i64, scratch_operands = 1 : i64, tpu.core_type = #tpu.core_type<tc>, window_params = [{transform_indices = @transform_0, window_bounds = array<i64: 1, 1, 8, 16>}, {transform_indices = @transform_1, window_bounds = array<i64: 1, 1, 8, 16>}, {transform_indices = @transform_2, window_bounds = array<i64: 1, 1, 8, 16>}, {pipeline_mode = #tpu.pipeline_mode<synchronous>, transform_indices = @transform_3, window_bounds = array<i64: 2, 16, 32>}, {pipeline_mode = #tpu.pipeline_mode<synchronous>, transform_indices = @transform_4, window_bounds = array<i64: 1, 32>}, {transform_indices = @transform_5, window_bounds = array<i64: 1, 8, 32>}, {transform_indices = @transform_6, window_bounds = array<i64: 1, 1, 8, 8>}]} {
    %c0 = arith.constant 0 : index
    %c0_0 = arith.constant 0 : index
    %c0_1 = arith.constant 0 : index
    %c0_2 = arith.constant 0 : index
    %0 = vector.load %arg3[%c0, %c0_0, %c0_1, %c0_2] : memref<1x1x8x16xbf16, #tpu.memory_space<vmem>>, vector<1x1x8x16xbf16>
    %1 = vector.shape_cast %0 : vector<1x1x8x16xbf16> to vector<8x16xbf16>
    %c0_3 = arith.constant 0 : index
    %c0_4 = arith.constant 0 : index
    %c0_5 = arith.constant 0 : index
    %c0_6 = arith.constant 0 : index
    %2 = vector.load %arg4[%c0_3, %c0_4, %c0_5, %c0_6] : memref<1x1x8x16xbf16, #tpu.memory_space<vmem>>, vector<1x1x8x16xbf16>
    %3 = vector.shape_cast %2 : vector<1x1x8x16xbf16> to vector<8x16xbf16>
    %c0_7 = arith.constant 0 : index
    %c0_8 = arith.constant 0 : index
    %c0_9 = arith.constant 0 : index
    %c0_10 = arith.constant 0 : index
    %4 = vector.load %arg5[%c0_7, %c0_8, %c0_9, %c0_10] : memref<1x1x8x16xbf16, #tpu.memory_space<vmem>>, vector<1x1x8x16xbf16>
    %5 = vector.shape_cast %4 : vector<1x1x8x16xbf16> to vector<8x16xbf16>
    %cst = arith.constant dense<0.000000e+00> : vector<8x8xf32>
    %6 = tpu.matmul %1, %3, %cst {dimension_numbers = #tpu.dot_dimension_numbers<[1], [1], [0], [0], [0, 0, 1, 0], [], []>} : vector<8x16xbf16>, vector<8x16xbf16>, vector<8x8xf32> -> vector<8x8xf32>
    %cst_11 = arith.constant dense<0xFF800000> : vector<8xf32>
    %7 = vector.multi_reduction <maximumf>, %6, %cst_11 [1] : vector<8x8xf32> to vector<8xf32>
    %8 = vector.shape_cast %7 : vector<8xf32> to vector<8x1xf32>
    %9 = vector.broadcast %8 : vector<8x1xf32> to vector<8x8xf32>
    %10 = arith.subf %6, %9 : vector<8x8xf32>
    %11 = math.exp %10 : vector<8x8xf32>
    %cst_12 = arith.constant dense<0.000000e+00> : vector<8xf32>
    %12 = vector.multi_reduction <add>, %11, %cst_12 [1] : vector<8x8xf32> to vector<8xf32>
    %13 = vector.shape_cast %12 : vector<8xf32> to vector<8x1xf32>
    %14 = tpu.reciprocal %13 {approx = true} : vector<8x1xf32> -> vector<8x1xf32>
    %15 = vector.broadcast %14 : vector<8x1xf32> to vector<8x8xf32>
    %16 = arith.mulf %11, %15 : vector<8x8xf32>
    %17 = arith.truncf %16 : vector<8x8xf32> to vector<8x8xbf16>
    %c0_13 = arith.constant 0 : index
    %c0_14 = arith.constant 0 : index
    %c0_15 = arith.constant 0 : index
    %c0_16 = arith.constant 0 : index
    %18 = vector.load %arg9[%c0_13, %c0_14, %c0_15, %c0_16] : memref<1x1x8x8xbf16, #tpu.memory_space<vmem>>, vector<1x1x8x8xbf16>
    %19 = vector.shape_cast %18 : vector<1x1x8x8xbf16> to vector<8x8xbf16>
    %20 = vector.shape_cast %17 : vector<8x8xbf16> to vector<1x1x8x8xbf16>
    tpu.vector_store %arg9[%c0_13, %c0_14, %c0_15, %c0_16], %20 {strides = array<i32>} : memref<1x1x8x8xbf16, #tpu.memory_space<vmem>>, vector<1x1x8x8xbf16>,
    %21 = arith.truncf %16 : vector<8x8xf32> to vector<8x8xbf16>
    %cst_17 = arith.constant dense<0.000000e+00> : vector<8x16xf32>
    %22 = tpu.matmul %21, %5, %cst_17 {dimension_numbers = #tpu.dot_dimension_numbers<[1], [0], [0], [1], [0, 0, 1, 1], [], []>} : vector<8x8xbf16>, vector<8x16xbf16>, vector<8x16xf32> -> vector<8x16xf32>
    %c0_i32 = arith.constant 0 : i32
    %23 = arith.cmpi eq, %arg2, %c0_i32 : i32
    %24 = arith.extui %23 : i1 to i32
    %c0_i32_18 = arith.constant 0 : i32
    %25 = arith.cmpi ne, %24, %c0_i32_18 : i32
    scf.if %25 {
      %cst_27 = arith.constant 0.000000e+00 : f32
      %37 = vector.broadcast %cst_27 : f32 to vector<8x32xf32>
      %c0_28 = arith.constant 0 : index
      %c0_29 = arith.constant 0 : index
      %38 = vector.load %arg10[%c0_28, %c0_29] : memref<8x32xf32, #tpu.memory_space<vmem>>, vector<8x32xf32>
      tpu.vector_store %arg10[%c0_28, %c0_29], %37 {strides = array<i32>} : memref<8x32xf32, #tpu.memory_space<vmem>>, vector<8x32xf32>,
    } else {
    }
    %26 = arith.index_cast %arg2 : i32 to index
    %c0_19 = arith.constant 0 : index
    %c0_20 = arith.constant 0 : index
    %27 = vector.load %arg6[%26, %c0_19, %c0_20] : memref<2x16x32xbf16, #tpu.memory_space<vmem>>, vector<1x16x32xbf16>
    %28 = vector.shape_cast %27 : vector<1x16x32xbf16> to vector<16x32xbf16>
    %c0_21 = arith.constant 0 : index
    %c0_22 = arith.constant 0 : index
    %29 = vector.load %arg10[%c0_21, %c0_22] : memref<8x32xf32, #tpu.memory_space<vmem>>, vector<8x32xf32>
    %30 = arith.truncf %22 : vector<8x16xf32> to vector<8x16xbf16>
    %cst_23 = arith.constant dense<0.000000e+00> : vector<8x32xf32>
    %31 = tpu.matmul %30, %28, %cst_23 {dimension_numbers = #tpu.dot_dimension_numbers<[1], [0], [0], [1], [0, 0, 1, 1], [], []>} : vector<8x16xbf16>, vector<16x32xbf16>, vector<8x32xf32> -> vector<8x32xf32>
    %32 = arith.addf %29, %31 : vector<8x32xf32>
    %c0_24 = arith.constant 0 : index
    %c0_25 = arith.constant 0 : index
    %33 = vector.load %arg10[%c0_24, %c0_25] : memref<8x32xf32, #tpu.memory_space<vmem>>, vector<8x32xf32>
    tpu.vector_store %arg10[%c0_24, %c0_25], %32 {strides = array<i32>} : memref<8x32xf32, #tpu.memory_space<vmem>>, vector<8x32xf32>,
    %c1_i32 = arith.constant 1 : i32
    %34 = arith.cmpi eq, %arg2, %c1_i32 : i32
    %35 = arith.extui %34 : i1 to i32
    %c0_i32_26 = arith.constant 0 : i32
    %36 = arith.cmpi ne, %35, %c0_i32_26 : i32
    scf.if %36 {
      %c0_27 = arith.constant 0 : index
      %c0_28 = arith.constant 0 : index
      %37 = vector.load %arg10[%c0_27, %c0_28] : memref<8x32xf32, #tpu.memory_space<vmem>>, vector<8x32xf32>
      %c0_29 = arith.constant 0 : index
      %c0_30 = arith.constant 0 : index
      %38 = vector.load %arg7[%c0_29, %c0_30] : memref<1x32xf32, #tpu.memory_space<vmem>>, vector<1x32xf32>
      %39 = vector.broadcast %38 : vector<1x32xf32> to vector<8x32xf32>
      %40 = arith.addf %37, %39 : vector<8x32xf32>
      %c0_31 = arith.constant 0 : index
      %c0_32 = arith.constant 0 : index
      %c0_33 = arith.constant 0 : index
      %41 = vector.load %arg8[%c0_31, %c0_32, %c0_33] : memref<1x8x32xf32, #tpu.memory_space<vmem>>, vector<1x8x32xf32>
      %42 = vector.shape_cast %41 : vector<1x8x32xf32> to vector<8x32xf32>
      %43 = vector.shape_cast %40 : vector<8x32xf32> to vector<1x8x32xf32>
      tpu.vector_store %arg8[%c0_31, %c0_32, %c0_33], %43 {strides = array<i32>} : memref<1x8x32xf32, #tpu.memory_space<vmem>>, vector<1x8x32xf32>,
    } else {
    }
    return
  }
  func.func @transform_0(%arg0: i32, %arg1: i32, %arg2: i32) -> (i32, i32, i32, i32) {
    %c0_i32 = arith.constant 0 : i32
    %c0_i32_0 = arith.constant 0 : i32
    return %arg0, %arg2, %arg1, %c0_i32 : i32, i32, i32, i32
  }
  func.func @transform_1(%arg0: i32, %arg1: i32, %arg2: i32) -> (i32, i32, i32, i32) {
    %c0_i32 = arith.constant 0 : i32
    %c0_i32_0 = arith.constant 0 : i32
    %c0_i32_1 = arith.constant 0 : i32
    return %arg0, %arg2, %c0_i32, %c0_i32_0 : i32, i32, i32, i32
  }
  func.func @transform_2(%arg0: i32, %arg1: i32, %arg2: i32) -> (i32, i32, i32, i32) {
    %c0_i32 = arith.constant 0 : i32
    %c0_i32_0 = arith.constant 0 : i32
    %c0_i32_1 = arith.constant 0 : i32
    return %arg0, %arg2, %c0_i32, %c0_i32_0 : i32, i32, i32, i32
  }
  func.func @transform_3(%arg0: i32, %arg1: i32, %arg2: i32) -> (i32, i32, i32) {
    %c0_i32 = arith.constant 0 : i32
    %c0_i32_0 = arith.constant 0 : i32
    %c0_i32_1 = arith.constant 0 : i32
    %c0_i32_2 = arith.constant 0 : i32
    return %c0_i32, %c0_i32_0, %c0_i32_1 : i32, i32, i32
  }
  func.func @transform_4(%arg0: i32, %arg1: i32, %arg2: i32) -> (i32, i32) {
    %c0_i32 = arith.constant 0 : i32
    %c0_i32_0 = arith.constant 0 : i32
    %c0_i32_1 = arith.constant 0 : i32
    return %c0_i32, %c0_i32_0 : i32, i32
  }
  func.func @transform_5(%arg0: i32, %arg1: i32, %arg2: i32) -> (i32, i32, i32) {
    %c0_i32 = arith.constant 0 : i32
    %c0_i32_0 = arith.constant 0 : i32
    return %arg0, %arg1, %c0_i32 : i32, i32, i32
  }
  func.func @transform_6(%arg0: i32, %arg1: i32, %arg2: i32) -> (i32, i32, i32, i32) {
    %c0_i32 = arith.constant 0 : i32
    %c0_i32_0 = arith.constant 0 : i32
    return %arg0, %arg2, %arg1, %c0_i32 : i32, i32, i32, i32
  }
}

</mosaic_0001>

<llo_original>
// kernel: tpu_custom_call.1
$region0: #{tpu_custom_call.1}
  #allocation0 [shape = 'u32[]', space=smem, size = 0x4, offset = 0x4, fixed_abs, tag = 'smem constant byte address 0x4 - core index']
  #allocation1 [shape = 'u32[144,128]{1,0:T(1,128)}', space=vmem, size = 0x12000, scoped, tag = 'internal scratch']
  #allocation2 [shape = 'f32[8,32]{1,0:T(8,128)}', space=vmem, size = 0x1000, scoped, tag = 'scratch operand']
  %s0 = inlined_call_operand.hbm [shape: bf16[2,2,8,16], index: 0, kind: input, shape index: {}]
  %s1 = inlined_call_operand.hbm [shape: bf16[2,2,8,16], index: 1, kind: input, shape index: {}]
  %s2 = inlined_call_operand.hbm [shape: bf16[2,2,8,16], index: 2, kind: input, shape index: {}]
  %s3 = inlined_call_operand.hbm [shape: bf16[2,16,32], index: 3, kind: input, shape index: {}]
  %s4 = inlined_call_operand.hbm [shape: f32[1,32], index: 4, kind: input, shape index: {}]
  %s5 = inlined_call_operand.hbm [shape: f32[2,8,32], index: 5, kind: output, shape index: {0}]
  %s6 = inlined_call_operand.hbm [shape: bf16[2,2,8,8], index: 6, kind: output, shape index: {1}]
  %7 = xla_tuple %s5, %s6
  %s8 = sld [smem:[#allocation0]]
  $region89: #{tpu_custom_call.1} parent=0
    _
  %s10 = ssub.s32 1, %s8
  %s11 = scalar_select 0, %s10, %s8
  $region1: #{tpu_custom_call.1} parent=0
    #allocation3 [shape = 'u8[4096]{0}', space=vmem, size = 0x1000, scoped, tag = 'input window, operand 0']
    #allocation4 [shape = 's32[2]{0}', space=sflag, size = 0x8, scoped, tag = 'scoped memory for tpu_custom_call.1']
    #allocation5 [shape = 's32[2]{0}', space=sflag, size = 0x8, scoped, tag = 'scoped memory for tpu_custom_call.1']
    #allocation6 [shape = 'u8[4096]{0}', space=vmem, size = 0x1000, scoped, tag = 'input window, operand 1']
    #allocation7 [shape = 's32[2]{0}', space=sflag, size = 0x8, scoped, tag = 'scoped memory for tpu_custom_call.1']
    #allocation8 [shape = 'u8[4096]{0}', space=vmem, size = 0x1000, scoped, tag = 'input window, operand 2']
    #allocation9 [shape = 'u8[8192]{0}', space=vmem, size = 0x2000, scoped, tag = 'input window, operand 3, single buffered']
    #allocation10 [shape = 's32[1]{0}', space=sflag, size = 0x4, scoped, tag = 'scoped memory for tpu_custom_call.1']
    #allocation11 [shape = 'u8[512]{0}', space=vmem, size = 0x400, scoped, tag = 'input window, operand 4, single buffered']
    #allocation12 [shape = 'u8[8192]{0}', space=vmem, size = 0x2000, scoped, tag = 'output window, operand 0']
    #allocation13 [shape = 'u8[4096]{0}', space=vmem, size = 0x1000, scoped, tag = 'output window, operand 1']
    #allocation14 [shape = 's32[2]{0}', space=sflag, size = 0x8, scoped, tag = 'scoped memory for tpu_custom_call.1']
    %12 = vsyncpa [#allocation4], 0
    %s13 = scalar_lea.sflag [#allocation4], 1
    %14 = vsyncpa %s13, 0
    %15 = vsyncpa [#allocation7], 0
    %s16 = scalar_lea.sflag [#allocation7], 1
    %17 = vsyncpa %s16, 0
    %18 = vsyncpa [#allocation10], 0
    %19 = vsyncpa [#allocation5], 0
    %s20 = scalar_lea.sflag [#allocation5], 1
    %21 = vsyncpa %s20, 0
    %22 = vsyncpa [#allocation14], 0
    %s23 = scalar_lea.sflag [#allocation14], 1
    %24 = vsyncpa %s23, 0
    loop: start=0, step=1, limit=6
    $region2: #{tpu_custom_call.1} parent=1 // loop_pre_header
      _
    $region3: #{tpu_custom_call.1} parent=1 // loop_header
      %s26 = sphi 0, %s30
      %p27 = scmp.ge.s32.totalorder %s26, 6
      %s33 = sphi 0, %s52
      %s34 = sphi 0, %s48
      %s35 = sphi 0, %s44
      %s36 = sphi 0, %s33
      %s37 = sphi 0, %s34
      %s38 = sphi 0, %s35
      %s39 = sphi 0, %s36
      %s40 = sphi 0, %s37
      %s41 = sphi 0, %s38
      %s59 = sphi 0, %s61
      %s62 = sphi 0, %s59
      %s63 = sphi 0, %s62
      %s79 = sphi 0, %s63
      %s87 = sphi 0, %s89
      %s90 = sphi 0, %s87
      %s91 = sphi 0, %s90
      %s107 = sphi 0, %s91
      %s115 = sphi 0, %s117
      %s118 = sphi 0, %s115
      %s119 = sphi 0, %s118
      %s135 = sphi 0, %s119
      %s139 = sphi 0, %s139
      %s141 = sphi 0, %s139
      %s142 = sphi 0, %s141
      %s156 = sphi 0, %s142
      %s160 = sphi 0, %s160
      %s162 = sphi 0, %s160
      %s163 = sphi 0, %s162
      %s177 = sphi 0, %s163
      %s185 = sphi 0, %s187
      %s188 = sphi 0, %s185
      %s189 = sphi 0, %s188
      %s205 = sphi 0, %s189
      %s215 = sphi 0, %s217
      %s218 = sphi 0, %s215
      %s219 = sphi 0, %s218
      %s235 = sphi 0, %s219
    $region4: #{tpu_custom_call.1} parent=1 // loop_header_branch
      %29 = sbr.rel (%p27) target = $region8
    $region5: #{tpu_custom_call.1} parent=1 // loop_body
      %s31 = ssub.s32 %s26, 1
      %s32 = ssub.s32 %s26, 2
      %s42 = sadd.s32 1, %s35
      %p43 = scmp.ge.s32.totalorder %s42, 2
      %s44 = scalar_select %p43, 0, %s42
      %s45 = sadd.s32 1, %s34
      %s46 = scalar_select %p43, %s45, %s34
      %p47 = scmp.ge.s32.totalorder %s46, 1
      %s48 = scalar_select %p47, 0, %s46
      %s49 = sadd.s32 1, %s33
      %s50 = scalar_select %p47, %s49, %s33
      %p51 = scmp.ge.s32.totalorder %s50, 2
      %s52 = scalar_select %p51, 0, %s50
      %s53 = ssub.s32 %s33, %s52
      %s54 = ssub.s32 %s35, %s44
      %s55 = sor.u32 %s53, %s54
      %s56 = ssub.s32 %s34, %s48
      %s57 = sor.u32 %s55, %s56
      %p58 = scmp.eq.s32.totalorder %s57, 0
      %s60 = sadd.s32 %s59, 1
      %s61 = scalar_select %p58, %s59, %s60
      %p64 = pneg %p58
      %p65 = scmp.eq.s32.totalorder %s26, 3
      %p66 = por %p64, %p65
      %p67 = scmp.ne.s32.totalorder %s59, %s62
      %p68 = scmp.eq.s32.totalorder %s26, 0
      %p69 = por %p67, %p68
      %p70 = scmp.ne.s32.totalorder %s59, %s62
      %p71 = scmp.eq.s32.totalorder %s31, 3
      %p72 = por %p70, %p71
      %p73 = scmp.ne.s32.totalorder %s62, %s63
      %p74 = scmp.eq.s32.totalorder %s31, 0
      %p75 = por %p73, %p74
      %p76 = scmp.ne.s32.totalorder %s62, %s63
      %p77 = scmp.eq.s32.totalorder %s32, 3
      %p78 = por %p76, %p77
      %p80 = scmp.ne.s32.totalorder %s63, %s79
      %p81 = scmp.eq.s32.totalorder %s32, 0
      %p82 = por %p80, %p81
      %s83 = ssub.s32 %s33, %s52
      %s84 = ssub.s32 %s35, %s44
      %s85 = sor.u32 %s83, %s84
      %p86 = scmp.eq.s32.totalorder %s85, 0
      %s88 = sadd.s32 %s87, 1
      %s89 = scalar_select %p86, %s87, %s88
      %p92 = pneg %p86
      %p93 = scmp.eq.s32.totalorder %s26, 3
      %p94 = por %p92, %p93
      %p95 = scmp.ne.s32.totalorder %s87, %s90
      %p96 = scmp.eq.s32.totalorder %s26, 0
      %p97 = por %p95, %p96
      %p98 = scmp.ne.s32.totalorder %s87, %s90
      %p99 = scmp.eq.s32.totalorder %s31, 3
      %p100 = por %p98, %p99
      %p101 = scmp.ne.s32.totalorder %s90, %s91
      %p102 = scmp.eq.s32.totalorder %s31, 0
      %p103 = por %p101, %p102
      %p104 = scmp.ne.s32.totalorder %s90, %s91
      %p105 = scmp.eq.s32.totalorder %s32, 3
      %p106 = por %p104, %p105
      %p108 = scmp.ne.s32.totalorder %s91, %s107
      %p109 = scmp.eq.s32.totalorder %s32, 0
      %p110 = por %p108, %p109
      %s111 = ssub.s32 %s33, %s52
      %s112 = ssub.s32 %s35, %s44
      %s113 = sor.u32 %s111, %s112
      %p114 = scmp.eq.s32.totalorder %s113, 0
      %s116 = sadd.s32 %s115, 1
      %s117 = scalar_select %p114, %s115, %s116
      %p120 = pneg %p114
      %p121 = scmp.eq.s32.totalorder %s26, 3
      %p122 = por %p120, %p121
      %p123 = scmp.ne.s32.totalorder %s115, %s118
      %p124 = scmp.eq.s32.totalorder %s26, 0
      %p125 = por %p123, %p124
      %p126 = scmp.ne.s32.totalorder %s115, %s118
      %p127 = scmp.eq.s32.totalorder %s31, 3
      %p128 = por %p126, %p127
      %p129 = scmp.ne.s32.totalorder %s118, %s119
      %p130 = scmp.eq.s32.totalorder %s31, 0
      %p131 = por %p129, %p130
      %p132 = scmp.ne.s32.totalorder %s118, %s119
      %p133 = scmp.eq.s32.totalorder %s32, 3
      %p134 = por %p132, %p133
      %p136 = scmp.ne.s32.totalorder %s119, %s135
      %p137 = scmp.eq.s32.totalorder %s32, 0
      %p138 = por %p136, %p137
      %s140 = sadd.s32 %s139, 1
      %p143 = scmp.eq.s32.totalorder %s26, 3
      %p144 = scmp.ne.s32.totalorder %s139, %s141
      %p145 = scmp.eq.s32.totalorder %s26, 0
      %p146 = por %p144, %p145
      %p147 = scmp.ne.s32.totalorder %s139, %s141
      %p148 = scmp.eq.s32.totalorder %s31, 3
      %p149 = por %p147, %p148
      %p150 = scmp.ne.s32.totalorder %s141, %s142
      %p151 = scmp.eq.s32.totalorder %s31, 0
      %p152 = por %p150, %p151
      %p153 = scmp.ne.s32.totalorder %s141, %s142
      %p154 = scmp.eq.s32.totalorder %s32, 3
      %p155 = por %p153, %p154
      %p157 = scmp.ne.s32.totalorder %s142, %s156
      %p158 = scmp.eq.s32.totalorder %s32, 0
      %p159 = por %p157, %p158
      %s161 = sadd.s32 %s160, 1
      %p164 = scmp.eq.s32.totalorder %s26, 3
      %p165 = scmp.ne.s32.totalorder %s160, %s162
      %p166 = scmp.eq.s32.totalorder %s26, 0
      %p167 = por %p165, %p166
      %p168 = scmp.ne.s32.totalorder %s160, %s162
      %p169 = scmp.eq.s32.totalorder %s31, 3
      %p170 = por %p168, %p169
      %p171 = scmp.ne.s32.totalorder %s162, %s163
      %p172 = scmp.eq.s32.totalorder %s31, 0
      %p173 = por %p171, %p172
      %p174 = scmp.ne.s32.totalorder %s162, %s163
      %p175 = scmp.eq.s32.totalorder %s32, 3
      %p176 = por %p174, %p175
      %p178 = scmp.ne.s32.totalorder %s163, %s177
      %p179 = scmp.eq.s32.totalorder %s32, 0
      %p180 = por %p178, %p179
      %s181 = ssub.s32 %s33, %s52
      %s182 = ssub.s32 %s34, %s48
      %s183 = sor.u32 %s181, %s182
      %p184 = scmp.eq.s32.totalorder %s183, 0
      %s186 = sadd.s32 %s185, 1
      %s187 = scalar_select %p184, %s185, %s186
      %p190 = pneg %p184
      %p191 = scmp.eq.s32.totalorder %s26, 3
      %p192 = por %p190, %p191
      %p193 = scmp.ne.s32.totalorder %s185, %s188
      %p194 = scmp.eq.s32.totalorder %s26, 0
      %p195 = por %p193, %p194
      %p196 = scmp.ne.s32.totalorder %s185, %s188
      %p197 = scmp.eq.s32.totalorder %s31, 3
      %p198 = por %p196, %p197
      %p199 = scmp.ne.s32.totalorder %s188, %s189
      %p200 = scmp.eq.s32.totalorder %s31, 0
      %p201 = por %p199, %p200
      %p202 = scmp.ne.s32.totalorder %s188, %s189
      %p203 = scmp.eq.s32.totalorder %s32, 3
      %p204 = por %p202, %p203
      %p206 = scmp.ne.s32.totalorder %s189, %s205
      %p207 = scmp.eq.s32.totalorder %s32, 0
      %p208 = por %p206, %p207
      %s209 = ssub.s32 %s33, %s52
      %s210 = ssub.s32 %s35, %s44
      %s211 = sor.u32 %s209, %s210
      %s212 = ssub.s32 %s34, %s48
      %s213 = sor.u32 %s211, %s212
      %p214 = scmp.eq.s32.totalorder %s213, 0
      %s216 = sadd.s32 %s215, 1
      %s217 = scalar_select %p214, %s215, %s216
      %p220 = pneg %p214
      %p221 = scmp.eq.s32.totalorder %s26, 3
      %p222 = por %p220, %p221
      %p223 = scmp.ne.s32.totalorder %s215, %s218
      %p224 = scmp.eq.s32.totalorder %s26, 0
      %p225 = por %p223, %p224
      %p226 = scmp.ne.s32.totalorder %s215, %s218
      %p227 = scmp.eq.s32.totalorder %s31, 3
      %p228 = por %p226, %p227
      %p229 = scmp.ne.s32.totalorder %s218, %s219
      %p230 = scmp.eq.s32.totalorder %s31, 0
      %p231 = por %p229, %p230
      %p232 = scmp.ne.s32.totalorder %s218, %s219
      %p233 = scmp.eq.s32.totalorder %s32, 3
      %p234 = por %p232, %p233
      %p236 = scmp.ne.s32.totalorder %s219, %s235
      %p237 = scmp.eq.s32.totalorder %s32, 0
      %p238 = por %p236, %p237
      %p239 = scmp.le.s32.totalorder 1, %s26
      %p240 = scmp.lt.s32.totalorder %s26, 5
      %p241 = pnand %p239, %p240
      %p242 = pneg %p241
      // Predicated region
      $region9: #{tpu_custom_call.1} parent=5 // pred_check
        _
      $region10: #{tpu_custom_call.1} parent=5 // pred_check_branch
        %244 = sbr.rel (%p241) target = $region12
      $region11: #{tpu_custom_call.1} parent=5 // pred_region
        %s245 = ssub.s32 %s26, 1
        // Predicated region
        $region13: #{tpu_custom_call.1} parent=11 // pred_check
          %p246 = pneg %p152
        $region14: #{tpu_custom_call.1} parent=11 // pred_check_branch
          %248 = sbr.rel (%p246) target = $region16
        $region15: #{tpu_custom_call.1} parent=11 // pred_region
          %s250 = ssub.s32 256, 256
          %251 = vsyncadd [#allocation10], %s250
          %s252 = sshll.u32 [#allocation9], 4
          %s253 = int_to_ptr.vmem [resolvable:$true] %s252
          %258 = dma.hbm_to_vmem [thread:$0]  %s3, 256, %s253, [#allocation10], 64, 64, 4
        $region16: #{tpu_custom_call.1} parent=11 // pred_fallthru
          _
        // Predicated region
        $region17: #{tpu_custom_call.1} parent=11 // pred_check
          %p259 = pneg %p173
        $region18: #{tpu_custom_call.1} parent=11 // pred_check_branch
          %261 = sbr.rel (%p259) target = $region20
        $region19: #{tpu_custom_call.1} parent=11 // pred_region
          %s263 = ssub.s32 16, 16
          %264 = vsyncadd [#allocation10], %s263
          %s266 = sshll.u32 [#allocation11], 4
          %s267 = int_to_ptr.vmem [resolvable:$true] %s266
          %269 = dma.hbm_to_vmem [thread:$0]  %s4, 16, %s267, [#allocation10]
        $region20: #{tpu_custom_call.1} parent=11 // pred_fallthru
          _
      $region12: #{tpu_custom_call.1} parent=5 // pred_fallthru
        _
      %p270 = scmp.lt.s32.totalorder %s26, 4
      // Predicated region
      $region21: #{tpu_custom_call.1} parent=5 // pred_check
        %p271 = pneg %p270
      $region22: #{tpu_custom_call.1} parent=5 // pred_check_branch
        %273 = sbr.rel (%p271) target = $region24
      $region23: #{tpu_custom_call.1} parent=5 // pred_region
        // Predicated region
        $region25: #{tpu_custom_call.1} parent=23 // pred_check
          %p274 = pneg %p69
        $region26: #{tpu_custom_call.1} parent=23 // pred_check_branch
          %276 = sbr.rel (%p274) target = $region28
        $region27: #{tpu_custom_call.1} parent=23 // pred_region
          %s277 = sand.u32 %s59, 1
          %s278 = scalar_lea.sflag [#allocation4], %s277
          %s279 = sand.u32 %s59, 1
          %s280 = smul.addr %s279, 4
          %s281 = scalar_lea.vmem [#allocation3], %s280
          %s283 = ssub.s32 64, 64
          %284 = vsyncadd %s278, %s283
          %s285 = sadd.s32 %s34, %s35
          %s286 = smul.addr %s33, 2
          %s287 = sadd.s32 %s285, %s286
          %s288 = smul.addr %s287, 64
          %s289 = scalar_lea.hbm %s0, %s288
          %s291 = sshll.u32 %s281, 4
          %s292 = int_to_ptr.vmem [resolvable:$true] %s291
          %294 = dma.hbm_to_vmem [thread:$0]  %s289, 64, %s292, %s278
        $region28: #{tpu_custom_call.1} parent=23 // pred_fallthru
          _
        // Predicated region
        $region29: #{tpu_custom_call.1} parent=23 // pred_check
          %p295 = pneg %p97
        $region30: #{tpu_custom_call.1} parent=23 // pred_check_branch
          %297 = sbr.rel (%p295) target = $region32
        $region31: #{tpu_custom_call.1} parent=23 // pred_region
          %s298 = sand.u32 %s26, 1
          %s299 = scalar_lea.sflag [#allocation7], %s298
          %s300 = sand.u32 %s87, 1
          %s301 = smul.addr %s300, 4
          %s302 = scalar_lea.vmem [#allocation6], %s301
          %s304 = ssub.s32 64, 64
          %305 = vsyncadd %s299, %s304
          %s306 = smul.addr %s33, 2
          %s307 = sadd.s32 %s35, %s306
          %s308 = smul.addr %s307, 64
          %s309 = scalar_lea.hbm %s1, %s308
          %s311 = sshll.u32 %s302, 4
          %s312 = int_to_ptr.vmem [resolvable:$true] %s311
          %314 = dma.hbm_to_vmem [thread:$0]  %s309, 64, %s312, %s299
        $region32: #{tpu_custom_call.1} parent=23 // pred_fallthru
          _
        // Predicated region
        $region33: #{tpu_custom_call.1} parent=23 // pred_check
          %p315 = pneg %p125
        $region34: #{tpu_custom_call.1} parent=23 // pred_check_branch
          %317 = sbr.rel (%p315) target = $region36
        $region35: #{tpu_custom_call.1} parent=23 // pred_region
          %s318 = sand.u32 %s26, 1
          %s319 = scalar_lea.sflag [#allocation7], %s318
          %s320 = sand.u32 %s115, 1
          %s321 = smul.addr %s320, 4
          %s322 = scalar_lea.vmem [#allocation8], %s321
          %s324 = ssub.s32 64, 64
          %325 = vsyncadd %s319, %s324
          %s326 = smul.addr %s33, 2
          %s327 = sadd.s32 %s35, %s326
          %s328 = smul.addr %s327, 64
          %s329 = scalar_lea.hbm %s2, %s328
          %s331 = sshll.u32 %s322, 4
          %s332 = int_to_ptr.vmem [resolvable:$true] %s331
          %334 = dma.hbm_to_vmem [thread:$0]  %s329, 64, %s332, %s319
        $region36: #{tpu_custom_call.1} parent=23 // pred_fallthru
          _
      $region24: #{tpu_custom_call.1} parent=5 // pred_fallthru
        _
      %p335 = scmp.le.s32.totalorder 1, %s26
      %p336 = scmp.lt.s32.totalorder %s26, 5
      %p337 = pnand %p335, %p336
      %p338 = pneg %p337
      // Predicated region
      $region37: #{tpu_custom_call.1} parent=5 // pred_check
        _
      $region38: #{tpu_custom_call.1} parent=5 // pred_check_branch
        %340 = sbr.rel (%p337) target = $region40
      $region39: #{tpu_custom_call.1} parent=5 // pred_region
        %s341 = ssub.s32 %s26, 1
        %s342 = sand.u32 %s62, 1
        %s343 = scalar_lea.sflag [#allocation4], %s342
        %s344 = sand.u32 %s62, 1
        %s345 = smul.addr %s344, 4
        %s346 = scalar_lea.vmem [#allocation3], %s345
        // Predicated region
        $region41: #{tpu_custom_call.1} parent=39 // pred_check
          %p347 = pneg %p75
        $region42: #{tpu_custom_call.1} parent=39 // pred_check_branch
          %349 = sbr.rel (%p347) target = $region44
        $region43: #{tpu_custom_call.1} parent=39 // pred_region
          %350 = dma.done %s343, 64
        $region44: #{tpu_custom_call.1} parent=39 // pred_fallthru
          _
        %s351 = sand.u32 %s31, 1
        %s352 = scalar_lea.sflag [#allocation7], %s351
        %s353 = sand.u32 %s90, 1
        %s354 = smul.addr %s353, 4
        %s355 = scalar_lea.vmem [#allocation6], %s354
        // Predicated region
        $region45: #{tpu_custom_call.1} parent=39 // pred_check
          %p356 = pneg %p103
        $region46: #{tpu_custom_call.1} parent=39 // pred_check_branch
          %358 = sbr.rel (%p356) target = $region48
        $region47: #{tpu_custom_call.1} parent=39 // pred_region
          %359 = dma.done %s352, 64
        $region48: #{tpu_custom_call.1} parent=39 // pred_fallthru
          _
        %s360 = sand.u32 %s31, 1
        %s361 = scalar_lea.sflag [#allocation7], %s360
        %s362 = sand.u32 %s118, 1
        %s363 = smul.addr %s362, 4
        %s364 = scalar_lea.vmem [#allocation8], %s363
        // Predicated region
        $region49: #{tpu_custom_call.1} parent=39 // pred_check
          %p365 = pneg %p131
        $region50: #{tpu_custom_call.1} parent=39 // pred_check_branch
          %367 = sbr.rel (%p365) target = $region52
        $region51: #{tpu_custom_call.1} parent=39 // pred_region
          %368 = dma.done %s361, 64
        $region52: #{tpu_custom_call.1} parent=39 // pred_fallthru
          _
        // Predicated region
        $region53: #{tpu_custom_call.1} parent=39 // pred_check
          %p369 = pneg %p152
        $region54: #{tpu_custom_call.1} parent=39 // pred_check_branch
          %371 = sbr.rel (%p369) target = $region56
        $region55: #{tpu_custom_call.1} parent=39 // pred_region
          %372 = dma.done [#allocation10], 256
        $region56: #{tpu_custom_call.1} parent=39 // pred_fallthru
          _
        // Predicated region
        $region57: #{tpu_custom_call.1} parent=39 // pred_check
          %p373 = pneg %p173
        $region58: #{tpu_custom_call.1} parent=39 // pred_check_branch
          %375 = sbr.rel (%p373) target = $region60
        $region59: #{tpu_custom_call.1} parent=39 // pred_region
          %376 = dma.done [#allocation10], 16
        $region60: #{tpu_custom_call.1} parent=39 // pred_fallthru
          _
        %s377 = sand.u32 %s62, 1
        %s378 = scalar_lea.sflag [#allocation4], %s377
        %s379 = sand.u32 %s62, 1
        %s380 = smul.addr %s379, 4
        %s381 = scalar_lea.vmem [#allocation3], %s380
        %p382 = pneg %p75
        %p383 = pneg %p72
        %s384 = sand.u32 %s31, 1
        %s385 = scalar_lea.sflag [#allocation7], %s384
        %s386 = sand.u32 %s90, 1
        %s387 = smul.addr %s386, 4
        %s388 = scalar_lea.vmem [#allocation6], %s387
        %p389 = pneg %p103
        %p390 = pneg %p100
        %s391 = sand.u32 %s31, 1
        %s392 = scalar_lea.sflag [#allocation7], %s391
        %s393 = sand.u32 %s118, 1
        %s394 = smul.addr %s393, 4
        %s395 = scalar_lea.vmem [#allocation8], %s394
        %p396 = pneg %p131
        %p397 = pneg %p128
        %p398 = pneg %p152
        %p399 = pneg %p149
        %p400 = pneg %p173
        %p401 = pneg %p170
        %p402 = pneg %p201
        %p403 = pneg %p198
        %s404 = sand.u32 %s188, 1
        %s405 = scalar_lea.sflag [#allocation5], %s404
        %s406 = sand.u32 %s188, 1
        %s407 = smul.addr %s406, 8
        %s408 = scalar_lea.vmem [#allocation12], %s407
        %p409 = pneg %p231
        %p410 = pneg %p228
        %s411 = sand.u32 %s218, 1
        %s412 = scalar_lea.sflag [#allocation14], %s411
        %s413 = sand.u32 %s218, 1
        %s414 = smul.addr %s413, 4
        %s415 = scalar_lea.vmem [#allocation13], %s414
        %v417 = vld [vmem:[%s346] sm:$0xf]
        %v418 = vld [vmem:[%s355] sm:$0xf]
        %v419 = vld [vmem:[%s364] sm:$0xf]
        %vm420 = vcmask 130048
        %v422 = vsel %vm420, %v417, 0
        %v425 = vsel %vm420, %v418, 0
        %427 = vmatprep.subr.bf16.mxu0 0
        %428 = vmatpush1.bf16.xpose.msra.mxu0 %v425
        %429 = vmatprep.subr.bf16.mxu0 0
        %430 = vmatpush1.bf16.xpose.msra.mxu0 0
        %431 = vmatprep.subr.bf16.mxu0 0
        %432 = vmatpush1.bf16.xpose.msra.mxu0 0
        %433 = vmatprep.subr.bf16.mxu0 0
        %434 = vmatpush1.bf16.xpose.msra.mxu0 0
        %435 = vmatprep.subr.bf16.mxu0 0
        %436 = vmatpush1.bf16.xpose.msra.mxu0 0
        %437 = vmatprep.subr.bf16.mxu0 0
        %438 = vmatpush1.bf16.xpose.msra.mxu0 0
        %439 = vmatprep.subr.bf16.mxu0 0
        %440 = vmatpush1.bf16.xpose.msra.mxu0 0
        %441 = vmatprep.subr.bf16.mxu0 0
        %442 = vmatpush1.bf16.xpose.msra.mxu0 0
        %443 = vmatprep.subr.bf16.mxu0 0
        %444 = vmatpush1.bf16.xpose.msra.mxu0 0
        %445 = vmatprep.subr.bf16.mxu0 0
        %446 = vmatpush1.bf16.xpose.msra.mxu0 0
        %447 = vmatprep.subr.bf16.mxu0 0
        %448 = vmatpush1.bf16.xpose.msra.mxu0 0
        %449 = vmatprep.subr.bf16.mxu0 0
        %450 = vmatpush1.bf16.xpose.msra.mxu0 0
        %451 = vmatprep.subr.bf16.mxu0 0
        %452 = vmatpush1.bf16.xpose.msra.mxu0 0
        %453 = vmatprep.subr.bf16.mxu0 0
        %454 = vmatpush1.bf16.xpose.msra.mxu0 0
        %455 = vmatprep.subr.bf16.mxu0 0
        %456 = vmatpush1.bf16.xpose.msra.mxu0 0
        %457 = vmatprep.subr.bf16.mxu0 0
        %458 = vmatpush1.bf16.xpose.msra.mxu0 0
        %459 = vmatprep.mubr.bf16.mxu0 0
        %460 = vmatmul.mubr.bf16.gmra.mrb[0].mxu0 %v422
        %v461 = vpop.f32.mrb[0].mxu0
        %v462 = vadd.f32 0.0, %v461
        %v463 = vpop.f32.mrb[0].mxu0
        %v464 = vpop.f32.mrb[0].mxu0
        %v465 = vpop.f32.mrb[0].mxu0
        %466 = vdwg.mxu0
        %vm467 = vcmask 64512
        %v468 = vsel %vm467, %v462, -inf
        %469 = vmax.xlane.f32.xlu0 %v468
        %v470 = vpop.xlane.xlu0 %469
        %v471 = vsub.f32 %v462, %v470
        %v472 = vmul.f32 %v471, 1.442695
        %v473 = vpow.pop %v472
        %v474 = vsel %vm467, %v473, 0.0
        %475 = vadd.xlane.f32.xlu0 %v474
        %v476 = vpop.xlane.xlu0 %475
        %v477 = vrcp.pop %v476
        %v478 = vmul.f32 %v473, %v477
        %v479 = vpack.c.bf16 %v478, %v478
        %vm480 = vcmask 60416
        %481 = vst.msk [vmem:[%s415] sm:$0xf] %vm480, %v479
        %v483 = vsel %vm467, %v479, 0
        %vm485 = vcmask 1043456
        %v487 = vsel %vm485, %v419, 0
        %489 = vmatprep.subr.bf16.mxu0 0
        %490 = vmatpush1.bf16.msra.mxu0 %v487
        %491 = vmatprep.subr.bf16.mxu0 0
        %492 = vmatpush1.bf16.msra.mxu0 0
        %493 = vmatprep.subr.bf16.mxu0 0
        %494 = vmatpush1.bf16.msra.mxu0 0
        %495 = vmatprep.subr.bf16.mxu0 0
        %496 = vmatpush1.bf16.msra.mxu0 0
        %497 = vmatprep.subr.bf16.mxu0 0
        %498 = vmatpush1.bf16.msra.mxu0 0
        %499 = vmatprep.subr.bf16.mxu0 0
        %500 = vmatpush1.bf16.msra.mxu0 0
        %501 = vmatprep.subr.bf16.mxu0 0
        %502 = vmatpush1.bf16.msra.mxu0 0
        %503 = vmatprep.subr.bf16.mxu0 0
        %504 = vmatpush1.bf16.msra.mxu0 0
        %505 = vmatprep.subr.bf16.mxu0 0
        %506 = vmatpush1.bf16.msra.mxu0 0
        %507 = vmatprep.subr.bf16.mxu0 0
        %508 = vmatpush1.bf16.msra.mxu0 0
        %509 = vmatprep.subr.bf16.mxu0 0
        %510 = vmatpush1.bf16.msra.mxu0 0
        %511 = vmatprep.subr.bf16.mxu0 0
        %512 = vmatpush1.bf16.msra.mxu0 0
        %513 = vmatprep.subr.bf16.mxu0 0
        %514 = vmatpush1.bf16.msra.mxu0 0
        %515 = vmatprep.subr.bf16.mxu0 0
        %516 = vmatpush1.bf16.msra.mxu0 0
        %517 = vmatprep.subr.bf16.mxu0 0
        %518 = vmatpush1.bf16.msra.mxu0 0
        %519 = vmatprep.subr.bf16.mxu0 0
        %520 = vmatpush1.bf16.msra.mxu0 0
        %521 = vmatprep.mubr.bf16.mxu0 0
        %522 = vmatmul.mubr.bf16.gmra.mrb[0].mxu0 %v483
        %v523 = vpop.f32.mrb[0].mxu0
        %v524 = vadd.f32 0.0, %v523
        %v525 = vpop.f32.mrb[0].mxu0
        %v526 = vpop.f32.mrb[0].mxu0
        %v527 = vpop.f32.mrb[0].mxu0
        %528 = vdwg.mxu0
        %p529 = scmp.eq.s32.totalorder %s38, 0
        // Predicated region
        $region61: #{tpu_custom_call.1} parent=39 // pred_check
          %p530 = pneg %p529
        $region62: #{tpu_custom_call.1} parent=39 // pred_check_branch
          %532 = sbr.rel (%p530) target = $region64
        $region63: #{tpu_custom_call.1} parent=39 // pred_region
          %vm533 = vcmask 261120
          %534 = vst.msk [vmem:[#allocation2] sm:$0xff] %vm533, 0.0
        $region64: #{tpu_custom_call.1} parent=39 // pred_fallthru
          _
        %s535 = smul.u32 %s38, 2
        %s536 = smul.addr %s535, 4
        %s537 = scalar_lea.vmem [#allocation9], %s536
        %v538 = vld [vmem:[%s537] sm:$0xf]
        %v539 = vld [vmem:[%s537 + $0x4] sm:$0xf]
        %v540 = vld [vmem:[#allocation2] sm:$0xff]
        %v541 = vpack.c.bf16 %v524, %v524
        %v544 = vunpack.c.l.b16 %v538
        %v545 = vunpack.c.l.b16 %v539
        %v546 = vpack.c.b16 %v545, %v544
        %v549 = vsel %vm420, %v541, 0
        %551 = vmatprep.subr.bf16.mxu0 0
        %552 = vmatpush1.bf16.msra.mxu0 %v546
        %553 = vmatprep.subr.bf16.mxu0 0
        %554 = vmatpush1.bf16.msra.mxu0 0
        %555 = vmatprep.subr.bf16.mxu0 0
        %556 = vmatpush1.bf16.msra.mxu0 0
        %557 = vmatprep.subr.bf16.mxu0 0
        %558 = vmatpush1.bf16.msra.mxu0 0
        %559 = vmatprep.subr.bf16.mxu0 0
        %560 = vmatpush1.bf16.msra.mxu0 0
        %561 = vmatprep.subr.bf16.mxu0 0
        %562 = vmatpush1.bf16.msra.mxu0 0
        %563 = vmatprep.subr.bf16.mxu0 0
        %564 = vmatpush1.bf16.msra.mxu0 0
        %565 = vmatprep.subr.bf16.mxu0 0
        %566 = vmatpush1.bf16.msra.mxu0 0
        %567 = vmatprep.subr.bf16.mxu0 0
        %568 = vmatpush1.bf16.msra.mxu0 0
        %569 = vmatprep.subr.bf16.mxu0 0
        %570 = vmatpush1.bf16.msra.mxu0 0
        %571 = vmatprep.subr.bf16.mxu0 0
        %572 = vmatpush1.bf16.msra.mxu0 0
        %573 = vmatprep.subr.bf16.mxu0 0
        %574 = vmatpush1.bf16.msra.mxu0 0
        %575 = vmatprep.subr.bf16.mxu0 0
        %576 = vmatpush1.bf16.msra.mxu0 0
        %577 = vmatprep.subr.bf16.mxu0 0
        %578 = vmatpush1.bf16.msra.mxu0 0
        %579 = vmatprep.subr.bf16.mxu0 0
        %580 = vmatpush1.bf16.msra.mxu0 0
        %581 = vmatprep.subr.bf16.mxu0 0
        %582 = vmatpush1.bf16.msra.mxu0 0
        %583 = vmatprep.mubr.bf16.mxu0 0
        %584 = vmatmul.mubr.bf16.gmra.mrb[0].mxu0 %v549
        %v585 = vpop.f32.mrb[0].mxu0
        %v586 = vadd.f32 0.0, %v585
        %v587 = vpop.f32.mrb[0].mxu0
        %v588 = vpop.f32.mrb[0].mxu0
        %v589 = vpop.f32.mrb[0].mxu0
        %590 = vdwg.mxu0
        %v591 = vadd.f32 %v540, %v586
        %vm592 = vcmask 261120
        %593 = vst.msk [vmem:[#allocation2] sm:$0xff] %vm592, %v591
        %p594 = scmp.eq.s32.totalorder %s38, 1
        // Predicated region
        $region65: #{tpu_custom_call.1} parent=39 // pred_check
          %p595 = pneg %p594
        $region66: #{tpu_custom_call.1} parent=39 // pred_check_branch
          %597 = sbr.rel (%p595) target = $region68
        $region67: #{tpu_custom_call.1} parent=39 // pred_region
          %v598 = vld [vmem:[#allocation2] sm:$0xff]
          %v599 = vld [vmem:[#allocation11] sm:$0x1]
          %v601 = vlaneseq
          %v602 = vshrl.u32 %v601, 7
          %v603 = vsub.s32 0, %v602
          %v604 = vrot.slane %v599, %v603
          %v606 = vadd.f32 %v598, %v604
          %607 = vst.msk [vmem:[%s408] sm:$0xff] %vm592, %v606
        $region68: #{tpu_custom_call.1} parent=39 // pred_fallthru
          _
        %s608 = sand.u32 %s188, 1
        %s609 = scalar_lea.sflag [#allocation5], %s608
        %s610 = sand.u32 %s188, 1
        %s611 = smul.addr %s610, 8
        %s612 = scalar_lea.vmem [#allocation12], %s611
        %s613 = sand.u32 %s218, 1
        %s614 = scalar_lea.sflag [#allocation14], %s613
        %s615 = sand.u32 %s218, 1
        %s616 = smul.addr %s615, 4
        %s617 = scalar_lea.vmem [#allocation13], %s616
        // Predicated region
        $region69: #{tpu_custom_call.1} parent=39 // pred_check
          %p618 = pneg %p198
        $region70: #{tpu_custom_call.1} parent=39 // pred_check_branch
          %620 = sbr.rel (%p618) target = $region72
        $region71: #{tpu_custom_call.1} parent=39 // pred_region
          %s622 = ssub.s32 128, 128
          %623 = vsyncadd %s609, %s622
          %s624 = sadd.s32 %s37, %s36
          %s625 = smul.addr %s624, 128
          %s626 = scalar_lea.hbm %s5, %s625
          %s628 = sshll.u32 %s612, 4
          %s629 = int_to_ptr.vmem [resolvable:$true] %s628
          %631 = dma.vmem_to_hbm [thread:$0]  %s629, 128, %s626, %s609
        $region72: #{tpu_custom_call.1} parent=39 // pred_fallthru
          _
        // Predicated region
        $region73: #{tpu_custom_call.1} parent=39 // pred_check
          %p632 = pneg %p228
        $region74: #{tpu_custom_call.1} parent=39 // pred_check_branch
          %634 = sbr.rel (%p632) target = $region76
        $region75: #{tpu_custom_call.1} parent=39 // pred_region
          %s636 = ssub.s32 64, 64
          %637 = vsyncadd %s614, %s636
          %s638 = sadd.s32 %s37, %s38
          %s639 = smul.addr %s36, 2
          %s640 = sadd.s32 %s638, %s639
          %s641 = smul.addr %s640, 64
          %s642 = scalar_lea.hbm %s6, %s641
          %s644 = sshll.u32 %s617, 4
          %s645 = int_to_ptr.vmem [resolvable:$true] %s644
          %647 = dma.vmem_to_hbm [thread:$0]  %s645, 64, %s642, %s614
        $region76: #{tpu_custom_call.1} parent=39 // pred_fallthru
          _
      $region40: #{tpu_custom_call.1} parent=5 // pred_fallthru
        _
      %p648 = scmp.le.s32.totalorder 2, %s26
      // Predicated region
      $region77: #{tpu_custom_call.1} parent=5 // pred_check
        %p649 = pneg %p648
      $region78: #{tpu_custom_call.1} parent=5 // pred_check_branch
        %651 = sbr.rel (%p649) target = $region80
      $region79: #{tpu_custom_call.1} parent=5 // pred_region
        %s652 = ssub.s32 %s26, 2
        // Predicated region
        $region81: #{tpu_custom_call.1} parent=79 // pred_check
          %p653 = pneg %p204
        $region82: #{tpu_custom_call.1} parent=79 // pred_check_branch
          %655 = sbr.rel (%p653) target = $region84
        $region83: #{tpu_custom_call.1} parent=79 // pred_region
          %s656 = sand.u32 %s189, 1
          %s657 = scalar_lea.sflag [#allocation5], %s656
          %s658 = sand.u32 %s189, 1
          %s659 = smul.addr %s658, 8
          %s660 = scalar_lea.vmem [#allocation12], %s659
          %661 = dma.done %s657, 128
        $region84: #{tpu_custom_call.1} parent=79 // pred_fallthru
          _
        // Predicated region
        $region85: #{tpu_custom_call.1} parent=79 // pred_check
          %p662 = pneg %p234
        $region86: #{tpu_custom_call.1} parent=79 // pred_check_branch
          %664 = sbr.rel (%p662) target = $region88
        $region87: #{tpu_custom_call.1} parent=79 // pred_region
          %s665 = sand.u32 %s219, 1
          %s666 = scalar_lea.sflag [#allocation14], %s665
          %s667 = sand.u32 %s219, 1
          %s668 = smul.addr %s667, 4
          %s669 = scalar_lea.vmem [#allocation13], %s668
          %670 = dma.done %s666, 64
        $region88: #{tpu_custom_call.1} parent=79 // pred_fallthru
          _
      $region80: #{tpu_custom_call.1} parent=5 // pred_fallthru
        _
    $region6: #{tpu_custom_call.1} parent=1 // loop_footer
      %s30 = sadd.s32 1, %s26
    $region7: #{tpu_custom_call.1} parent=1 // loop_footer_branch
      %25 = sbr.rel target = $region3
    $region8: #{tpu_custom_call.1} parent=1 // loop_exit
      _
    %671 = vsyncpa [#allocation4], 1
    %s672 = scalar_lea.sflag [#allocation4], 1
    %673 = vsyncpa %s672, 1
    %674 = vsyncpa [#allocation7], 1
    %s675 = scalar_lea.sflag [#allocation7], 1
    %676 = vsyncpa %s675, 1
    %677 = vsyncpa [#allocation10], 1
    %678 = vsyncpa [#allocation5], 1
    %s679 = scalar_lea.sflag [#allocation5], 1
    %680 = vsyncpa %s679, 1
    %681 = vsyncpa [#allocation14], 1
    %s682 = scalar_lea.sflag [#allocation14], 1
    %683 = vsyncpa %s682, 1

</llo_original>
